<compile_context>
chip_gen: v7x
topology: tpu7x:2x2x1
jax: 0.10.0
libtpu: 0.0.40
codegen_flags: <defaults>
</compile_context>

<pallas_src>
import jax
import jax.numpy as jnp
from jax.experimental import pallas as pl
from jax.experimental.pallas import tpu as pltpu


def _make_lif_kernel(return_mem):
    """Build the kernel body; grid = (feature_tile, time_block)."""

    def kernel(x_ref, th_ref, sig_ref, *rest):
        if return_mem:
            spike_ref, memout_ref, mem_state = rest
        else:
            (spike_ref, mem_state), memout_ref = rest, None

        # Reset the carried membrane state at the start of each feature tile's
        # time sweep (time grid axis is innermost / fastest varying).
        @pl.when(pl.program_id(1) == 0)
        def _():
            mem_state[...] = jnp.zeros_like(mem_state)

        state_shape = mem_state.shape  # (N, TG, 128)
        # Hoist the broadcasts once — JAX does not CSE broadcast_in_dim, and
        # re-materializing them 2x per unrolled timestep is pure filler VALU/vld.
        th = jnp.broadcast_to(th_ref[...][None], state_shape)
        sig = jnp.broadcast_to(sig_ref[...][None], state_shape)
        mem = mem_state[...]

        one = jnp.float32(1.0)
        zero = jnp.float32(0.0)
        tb = x_ref.shape[1]  # static number of folded timesteps (<= 32)
        for t in range(tb):  # fully unrolled; working set is capped by TG
            mem = (x_ref[:, t] - mem) * sig + mem
            # Same comparison form as PyTorch's act(mem - thresh): (mem-th) >= 0.
            ge = (mem - th) >= zero
            spike_ref[:, t] = jnp.where(ge, one, zero).astype(spike_ref.dtype)
            mem = jnp.where(ge, zero, mem)  # fused reset: (1 - spike) * mem
            if return_mem:
                memout_ref[:, t] = mem.astype(memout_ref.dtype)

        mem_state[...] = mem

    return kernel


def _pick_tiles(N, T, G, *, spike_itemsize, max_block_bytes,
                max_state_bytes=128 * 1024, max_time_block=32):
    """Choose (time_block TB, feature_tile TG)."""
    # Sublane alignment for the spike output tile: 16 rows for bf16, 8 for f32.
    align = 16 if spike_itemsize < 4 else 8
    # Cap TG so the per-timestep working set (mem/x_t/spike each N*TG*128 f32)
    # stays small inside the fully unrolled time loop (avoids vreg spills).
    tg_cap = max(align, max_state_bytes // (N * 128 * 4))
    tg = G
    if G % align == 0:
        cands = [d for d in range(align, G + 1, align) if G % d == 0 and d <= tg_cap]
        if cands:
            # Prefer an even tile count >= 2 so the "parallel" feature axis
            # load-balances across the 2 TensorCores on v7x.
            even = [d for d in cands if (G // d) % 2 == 0]
            tg = max(even) if even else max(cands)
    # Time block: fold as many timesteps as fit the per-stream DMA budget.
    per_t_bytes = N * tg * 128 * 4
    tb = 1
    for d in range(1, T + 1):
        if T % d == 0 and d <= max_time_block and d * per_t_bytes <= max_block_bytes:
            tb = d
    return tb, tg


def lif_forward(x_ntchw, thresh_chw, tau_chw, *, time_block=None, feature_tile=None,
                spike_dtype=jnp.bfloat16, return_mem=True,
                max_block_bytes=2 * 1024 * 1024,           # raise to 4-6 MiB on v5e/v6e
                vmem_limit_bytes=32 * 1024 * 1024):         # raise to 64 MiB on v5e/v6e
    """x_ntchw: [N, T, C, H, W] float32.

    Returns (spike, mem) of shape [N, T, C, H, W].  Spikes are exactly {0,1}
    and stored as `spike_dtype` (bf16 is lossless); mem is float32 and is None
    when return_mem=False (saves ~1/3 of HBM traffic).
    """
    N, T, C, H, W = x_ntchw.shape
    F = C * H * W
    if F % 128 != 0:
        raise ValueError("C*H*W must be a multiple of 128 for a lane-dense layout")
    G = F // 128

    spike_itemsize = jnp.dtype(spike_dtype).itemsize
    auto_tb, auto_tg = _pick_tiles(N, T, G, spike_itemsize=spike_itemsize,
                                   max_block_bytes=max_block_bytes)
    TB = time_block if time_block is not None else auto_tb
    TG = feature_tile if feature_tile is not None else auto_tg
    assert T % TB == 0 and G % TG == 0

    # Free, contiguous reshapes only — no HBM transposes.
    x = x_ntchw.reshape(N, T, G, 128).astype(jnp.float32)
    th = thresh_chw.reshape(G, 128).astype(jnp.float32)
    # tau_x = -log(tau - 1); sigmoid(tau_x) exactly as the PyTorch module.
    # (NaN/Inf for tau <= 1, mirroring PyTorch.)
    sig = jax.nn.sigmoid(-jnp.log(tau_chw.astype(jnp.float32) - 1.0)).reshape(G, 128)

    block = (N, TB, TG, 128)
    io_map = lambda g, t: (0, t, g, 0)
    par_map = lambda g, t: (g, 0)

    if return_mem:
        out_shape = (jax.ShapeDtypeStruct((N, T, G, 128), spike_dtype),
                     jax.ShapeDtypeStruct((N, T, G, 128), jnp.float32))
        out_specs = [pl.BlockSpec(block, io_map), pl.BlockSpec(block, io_map)]
    else:
        out_shape = jax.ShapeDtypeStruct((N, T, G, 128), spike_dtype)
        out_specs = pl.BlockSpec(block, io_map)

    grid_spec = pltpu.PrefetchScalarGridSpec(
        num_scalar_prefetch=0,
        grid=(G // TG, T // TB),
        in_specs=[
            pl.BlockSpec(block, io_map),         # x
            pl.BlockSpec((TG, 128), par_map),    # thresh   (t-invariant -> resident)
            pl.BlockSpec((TG, 128), par_map),    # sigmoid(tau_x)
        ],
        out_specs=out_specs,
        scratch_shapes=[pltpu.VMEM((N, TG, 128), jnp.float32)],  # carried membrane
    )

    outs = pl.pallas_call(
        _make_lif_kernel(return_mem),
        out_shape=out_shape,
        grid_spec=grid_spec,
        compiler_params=pltpu.CompilerParams(
            dimension_semantics=("parallel", "arbitrary"),
            vmem_limit_bytes=vmem_limit_bytes,
        ),
    )(x, th, sig)

    if return_mem:
        spike4, mem4 = outs
        return spike4.reshape(N, T, C, H, W), mem4.reshape(N, T, C, H, W)
    return outs.reshape(N, T, C, H, W), None


def _lif_reference(x_ntchw, thresh_chw, tau_chw):
    """Pure-JAX reference mirroring the PyTorch loop."""
    sig = jax.nn.sigmoid(-jnp.log(tau_chw - 1.0))
    T = x_ntchw.shape[1]
    mem = jnp.zeros_like(x_ntchw[:, 0])
    spikes, mems = [], []
    for t in range(T):
        mem = (x_ntchw[:, t] - mem) * sig + mem
        spike = (mem - thresh_chw >= 0.0).astype(mem.dtype)
        mem = (1.0 - spike) * mem
        spikes.append(spike)
        mems.append(mem)
    return jnp.stack(spikes, axis=1), jnp.stack(mems, axis=1)


if __name__ == "__main__":
    key = jax.random.PRNGKey(0)

    def make_case(k, N, T, C, H, W):
        kx, kth, ktau = jax.random.split(k, 3)
        x = jax.random.normal(kx, (N, T, C, H, W), dtype=jnp.float32)
        # Heterogeneous per-element parameters (tensor branch of __init__).
        thresh = 0.1 * jax.random.normal(kth, (C, H, W), jnp.float32) + 0.5
        tau = 0.05 * jax.random.normal(ktau, (C, H, W), jnp.float32) + 2.0
        return x, thresh, tau

    k1, k2 = jax.random.split(key)

    # Case 1: N=2, T=8, C=4, 16x16 (F=1024 -> G=8); bf16 spikes + f32 mem trace.
    x1, th1, tau1 = make_case(k1, 2, 8, 4, 16, 16)
    ref_s1, ref_m1 = _lif_reference(x1, th1, tau1)

    s1, m1 = lif_forward(x1, th1, tau1)                  # auto tiles: grid (1, 1)
    jax.block_until_ready((s1, m1))
    assert s1.shape == x1.shape and m1.shape == x1.shape
    assert s1.dtype == jnp.bfloat16 and m1.dtype == jnp.float32
    assert jnp.allclose(s1.astype(jnp.float32), ref_s1, atol=1e-6)
    assert jnp.allclose(m1, ref_m1, atol=1e-5)

    # Same case with the membrane state carried across time grid steps.
    s1b, m1b = lif_forward(x1, th1, tau1, time_block=2)  # grid (1, 4)
    jax.block_until_ready((s1b, m1b))
    assert jnp.allclose(s1b.astype(jnp.float32), ref_s1, atol=1e-6)
    assert jnp.allclose(m1b, ref_m1, atol=1e-5)

    # Case 2: F=4096 -> G=32 -> two 16-wide feature tiles (parallel axis) x two
    # time blocks, spike-only output (mem HBM stream dropped entirely).
    x2, th2, tau2 = make_case(k2, 2, 4, 4, 16, 64)
    ref_s2, _ = _lif_reference(x2, th2, tau2)
    s2, m2 = lif_forward(x2, th2, tau2, time_block=2, return_mem=False)  # grid (2, 2)
    jax.block_until_ready(s2)
    assert m2 is None
    assert jnp.allclose(s2.astype(jnp.float32), ref_s2, atol=1e-6)

    print("KERNEL_OK")
</pallas_src>

<mosaic_0001>
module attributes {stable_mosaic.version = 11 : i64} {
  func.func @kernel(%arg0: i32, %arg1: i32, %arg2: memref<2x8x8x128xf32, #tpu.memory_space<vmem>>, %arg3: memref<8x128xf32, #tpu.memory_space<vmem>>, %arg4: memref<8x128xf32, #tpu.memory_space<vmem>>, %arg5: memref<2x8x8x128xbf16, #tpu.memory_space<vmem>>, %arg6: memref<2x8x8x128xf32, #tpu.memory_space<vmem>>, %arg7: memref<2x8x128xf32, #tpu.memory_space<vmem>>) attributes {dimension_semantics = [#tpu.dimension_semantics<parallel>, #tpu.dimension_semantics<arbitrary>], iteration_bounds = array<i64: 1, 1>, scalar_prefetch = 0 : i64, scratch_operands = 1 : i64, tpu.core_type = #tpu.core_type<tc>, window_params = [{transform_indices = @transform_0, window_bounds = array<i64: 2, 8, 8, 128>}, {transform_indices = @transform_1, window_bounds = array<i64: 8, 128>}, {transform_indices = @transform_2, window_bounds = array<i64: 8, 128>}, {transform_indices = @transform_3, window_bounds = array<i64: 2, 8, 8, 128>}, {transform_indices = @transform_4, window_bounds = array<i64: 2, 8, 8, 128>}]} {
    %c0_i32 = arith.constant 0 : i32
    %0 = arith.cmpi eq, %arg1, %c0_i32 : i32
    %1 = arith.extui %0 : i1 to i32
    %c0_i32_0 = arith.constant 0 : i32
    %2 = arith.cmpi ne, %1, %c0_i32_0 : i32
    scf.if %2 {
      %cst_130 = arith.constant 0.000000e+00 : f32
      %173 = vector.broadcast %cst_130 : f32 to vector<2x8x128xf32>
      %c0_131 = arith.constant 0 : index
      %c0_132 = arith.constant 0 : index
      %c0_133 = arith.constant 0 : index
      %174 = vector.load %arg7[%c0_131, %c0_132, %c0_133] : memref<2x8x128xf32, #tpu.memory_space<vmem>>, vector<2x8x128xf32>
      tpu.vector_store %arg7[%c0_131, %c0_132, %c0_133], %173 {strides = array<i32>} : memref<2x8x128xf32, #tpu.memory_space<vmem>>, vector<2x8x128xf32>,
    } else {
    }
    %c0 = arith.constant 0 : index
    %c0_1 = arith.constant 0 : index
    %3 = vector.load %arg3[%c0, %c0_1] : memref<8x128xf32, #tpu.memory_space<vmem>>, vector<8x128xf32>
    %4 = vector.shape_cast %3 : vector<8x128xf32> to vector<1x8x128xf32>
    %5 = vector.shape_cast %4 : vector<1x8x128xf32> to vector<1x8x128xf32>
    %6 = vector.broadcast %5 : vector<1x8x128xf32> to vector<2x8x128xf32>
    %c0_2 = arith.constant 0 : index
    %c0_3 = arith.constant 0 : index
    %7 = vector.load %arg4[%c0_2, %c0_3] : memref<8x128xf32, #tpu.memory_space<vmem>>, vector<8x128xf32>
    %8 = vector.shape_cast %7 : vector<8x128xf32> to vector<1x8x128xf32>
    %9 = vector.shape_cast %8 : vector<1x8x128xf32> to vector<1x8x128xf32>
    %10 = vector.broadcast %9 : vector<1x8x128xf32> to vector<2x8x128xf32>
    %c0_4 = arith.constant 0 : index
    %c0_5 = arith.constant 0 : index
    %c0_6 = arith.constant 0 : index
    %11 = vector.load %arg7[%c0_4, %c0_5, %c0_6] : memref<2x8x128xf32, #tpu.memory_space<vmem>>, vector<2x8x128xf32>
    %c0_7 = arith.constant 0 : index
    %c0_8 = arith.constant 0 : index
    %c0_9 = arith.constant 0 : index
    %c0_10 = arith.constant 0 : index
    %12 = vector.load %arg2[%c0_7, %c0_8, %c0_9, %c0_10] : memref<2x8x8x128xf32, #tpu.memory_space<vmem>>, vector<2x1x8x128xf32>
    %13 = vector.shape_cast %12 : vector<2x1x8x128xf32> to vector<2x8x128xf32>
    %14 = arith.subf %13, %11 : vector<2x8x128xf32>
    %15 = arith.mulf %14, %10 : vector<2x8x128xf32>
    %16 = arith.addf %15, %11 : vector<2x8x128xf32>
    %17 = arith.subf %16, %6 : vector<2x8x128xf32>
    %cst = arith.constant 0.000000e+00 : f32
    %18 = vector.broadcast %cst : f32 to vector<2x8x128xf32>
    %19 = arith.cmpf oge, %17, %18 : vector<2x8x128xf32>
    %cst_11 = arith.constant 1.000000e+00 : f32
    %cst_12 = arith.constant 0.000000e+00 : f32
    %20 = vector.broadcast %cst_11 : f32 to vector<2x8x128xf32>
    %21 = vector.broadcast %cst_12 : f32 to vector<2x8x128xf32>
    %22 = arith.select %19, %20, %21 : vector<2x8x128xi1>, vector<2x8x128xf32>
    %23 = arith.truncf %22 : vector<2x8x128xf32> to vector<2x8x128xbf16>
    %c0_13 = arith.constant 0 : index
    %c0_14 = arith.constant 0 : index
    %c0_15 = arith.constant 0 : index
    %c0_16 = arith.constant 0 : index
    %24 = vector.load %arg5[%c0_13, %c0_14, %c0_15, %c0_16] : memref<2x8x8x128xbf16, #tpu.memory_space<vmem>>, vector<2x1x8x128xbf16>
    %25 = vector.shape_cast %24 : vector<2x1x8x128xbf16> to vector<2x8x128xbf16>
    %26 = vector.shape_cast %23 : vector<2x8x128xbf16> to vector<2x1x8x128xbf16>
    tpu.vector_store %arg5[%c0_13, %c0_14, %c0_15, %c0_16], %26 {strides = array<i32>} : memref<2x8x8x128xbf16, #tpu.memory_space<vmem>>, vector<2x1x8x128xbf16>,
    %cst_17 = arith.constant 0.000000e+00 : f32
    %27 = vector.broadcast %cst_17 : f32 to vector<2x8x128xf32>
    %28 = arith.select %19, %27, %16 : vector<2x8x128xi1>, vector<2x8x128xf32>
    %c0_18 = arith.constant 0 : index
    %c0_19 = arith.constant 0 : index
    %c0_20 = arith.constant 0 : index
    %c0_21 = arith.constant 0 : index
    %29 = vector.load %arg6[%c0_18, %c0_19, %c0_20, %c0_21] : memref<2x8x8x128xf32, #tpu.memory_space<vmem>>, vector<2x1x8x128xf32>
    %30 = vector.shape_cast %29 : vector<2x1x8x128xf32> to vector<2x8x128xf32>
    %31 = vector.shape_cast %28 : vector<2x8x128xf32> to vector<2x1x8x128xf32>
    tpu.vector_store %arg6[%c0_18, %c0_19, %c0_20, %c0_21], %31 {strides = array<i32>} : memref<2x8x8x128xf32, #tpu.memory_space<vmem>>, vector<2x1x8x128xf32>,
    %c0_22 = arith.constant 0 : index
    %c1 = arith.constant 1 : index
    %c0_23 = arith.constant 0 : index
    %c0_24 = arith.constant 0 : index
    %32 = vector.load %arg2[%c0_22, %c1, %c0_23, %c0_24] : memref<2x8x8x128xf32, #tpu.memory_space<vmem>>, vector<2x1x8x128xf32>
    %33 = vector.shape_cast %32 : vector<2x1x8x128xf32> to vector<2x8x128xf32>
    %34 = arith.subf %33, %28 : vector<2x8x128xf32>
    %35 = arith.mulf %34, %10 : vector<2x8x128xf32>
    %36 = arith.addf %35, %28 : vector<2x8x128xf32>
    %37 = arith.subf %36, %6 : vector<2x8x128xf32>
    %cst_25 = arith.constant 0.000000e+00 : f32
    %38 = vector.broadcast %cst_25 : f32 to vector<2x8x128xf32>
    %39 = arith.cmpf oge, %37, %38 : vector<2x8x128xf32>
    %cst_26 = arith.constant 1.000000e+00 : f32
    %cst_27 = arith.constant 0.000000e+00 : f32
    %40 = vector.broadcast %cst_26 : f32 to vector<2x8x128xf32>
    %41 = vector.broadcast %cst_27 : f32 to vector<2x8x128xf32>
    %42 = arith.select %39, %40, %41 : vector<2x8x128xi1>, vector<2x8x128xf32>
    %43 = arith.truncf %42 : vector<2x8x128xf32> to vector<2x8x128xbf16>
    %c0_28 = arith.constant 0 : index
    %c1_29 = arith.constant 1 : index
    %c0_30 = arith.constant 0 : index
    %c0_31 = arith.constant 0 : index
    %44 = vector.load %arg5[%c0_28, %c1_29, %c0_30, %c0_31] : memref<2x8x8x128xbf16, #tpu.memory_space<vmem>>, vector<2x1x8x128xbf16>
    %45 = vector.shape_cast %44 : vector<2x1x8x128xbf16> to vector<2x8x128xbf16>
    %46 = vector.shape_cast %43 : vector<2x8x128xbf16> to vector<2x1x8x128xbf16>
    tpu.vector_store %arg5[%c0_28, %c1_29, %c0_30, %c0_31], %46 {strides = array<i32>} : memref<2x8x8x128xbf16, #tpu.memory_space<vmem>>, vector<2x1x8x128xbf16>,
    %cst_32 = arith.constant 0.000000e+00 : f32
    %47 = vector.broadcast %cst_32 : f32 to vector<2x8x128xf32>
    %48 = arith.select %39, %47, %36 : vector<2x8x128xi1>, vector<2x8x128xf32>
    %c0_33 = arith.constant 0 : index
    %c1_34 = arith.constant 1 : index
    %c0_35 = arith.constant 0 : index
    %c0_36 = arith.constant 0 : index
    %49 = vector.load %arg6[%c0_33, %c1_34, %c0_35, %c0_36] : memref<2x8x8x128xf32, #tpu.memory_space<vmem>>, vector<2x1x8x128xf32>
    %50 = vector.shape_cast %49 : vector<2x1x8x128xf32> to vector<2x8x128xf32>
    %51 = vector.shape_cast %48 : vector<2x8x128xf32> to vector<2x1x8x128xf32>
    tpu.vector_store %arg6[%c0_33, %c1_34, %c0_35, %c0_36], %51 {strides = array<i32>} : memref<2x8x8x128xf32, #tpu.memory_space<vmem>>, vector<2x1x8x128xf32>,
    %c0_37 = arith.constant 0 : index
    %c2 = arith.constant 2 : index
    %c0_38 = arith.constant 0 : index
    %c0_39 = arith.constant 0 : index
    %52 = vector.load %arg2[%c0_37, %c2, %c0_38, %c0_39] : memref<2x8x8x128xf32, #tpu.memory_space<vmem>>, vector<2x1x8x128xf32>
    %53 = vector.shape_cast %52 : vector<2x1x8x128xf32> to vector<2x8x128xf32>
    %54 = arith.subf %53, %48 : vector<2x8x128xf32>
    %55 = arith.mulf %54, %10 : vector<2x8x128xf32>
    %56 = arith.addf %55, %48 : vector<2x8x128xf32>
    %57 = arith.subf %56, %6 : vector<2x8x128xf32>
    %cst_40 = arith.constant 0.000000e+00 : f32
    %58 = vector.broadcast %cst_40 : f32 to vector<2x8x128xf32>
    %59 = arith.cmpf oge, %57, %58 : vector<2x8x128xf32>
    %cst_41 = arith.constant 1.000000e+00 : f32
    %cst_42 = arith.constant 0.000000e+00 : f32
    %60 = vector.broadcast %cst_41 : f32 to vector<2x8x128xf32>
    %61 = vector.broadcast %cst_42 : f32 to vector<2x8x128xf32>
    %62 = arith.select %59, %60, %61 : vector<2x8x128xi1>, vector<2x8x128xf32>
    %63 = arith.truncf %62 : vector<2x8x128xf32> to vector<2x8x128xbf16>
    %c0_43 = arith.constant 0 : index
    %c2_44 = arith.constant 2 : index
    %c0_45 = arith.constant 0 : index
    %c0_46 = arith.constant 0 : index
    %64 = vector.load %arg5[%c0_43, %c2_44, %c0_45, %c0_46] : memref<2x8x8x128xbf16, #tpu.memory_space<vmem>>, vector<2x1x8x128xbf16>
    %65 = vector.shape_cast %64 : vector<2x1x8x128xbf16> to vector<2x8x128xbf16>
    %66 = vector.shape_cast %63 : vector<2x8x128xbf16> to vector<2x1x8x128xbf16>
    tpu.vector_store %arg5[%c0_43, %c2_44, %c0_45, %c0_46], %66 {strides = array<i32>} : memref<2x8x8x128xbf16, #tpu.memory_space<vmem>>, vector<2x1x8x128xbf16>,
    %cst_47 = arith.constant 0.000000e+00 : f32
    %67 = vector.broadcast %cst_47 : f32 to vector<2x8x128xf32>
    %68 = arith.select %59, %67, %56 : vector<2x8x128xi1>, vector<2x8x128xf32>
    %c0_48 = arith.constant 0 : index
    %c2_49 = arith.constant 2 : index
    %c0_50 = arith.constant 0 : index
    %c0_51 = arith.constant 0 : index
    %69 = vector.load %arg6[%c0_48, %c2_49, %c0_50, %c0_51] : memref<2x8x8x128xf32, #tpu.memory_space<vmem>>, vector<2x1x8x128xf32>
    %70 = vector.shape_cast %69 : vector<2x1x8x128xf32> to vector<2x8x128xf32>
    %71 = vector.shape_cast %68 : vector<2x8x128xf32> to vector<2x1x8x128xf32>
    tpu.vector_store %arg6[%c0_48, %c2_49, %c0_50, %c0_51], %71 {strides = array<i32>} : memref<2x8x8x128xf32, #tpu.memory_space<vmem>>, vector<2x1x8x128xf32>,
    %c0_52 = arith.constant 0 : index
    %c3 = arith.constant 3 : index
    %c0_53 = arith.constant 0 : index
    %c0_54 = arith.constant 0 : index
    %72 = vector.load %arg2[%c0_52, %c3, %c0_53, %c0_54] : memref<2x8x8x128xf32, #tpu.memory_space<vmem>>, vector<2x1x8x128xf32>
    %73 = vector.shape_cast %72 : vector<2x1x8x128xf32> to vector<2x8x128xf32>
    %74 = arith.subf %73, %68 : vector<2x8x128xf32>
    %75 = arith.mulf %74, %10 : vector<2x8x128xf32>
    %76 = arith.addf %75, %68 : vector<2x8x128xf32>
    %77 = arith.subf %76, %6 : vector<2x8x128xf32>
    %cst_55 = arith.constant 0.000000e+00 : f32
    %78 = vector.broadcast %cst_55 : f32 to vector<2x8x128xf32>
    %79 = arith.cmpf oge, %77, %78 : vector<2x8x128xf32>
    %cst_56 = arith.constant 1.000000e+00 : f32
    %cst_57 = arith.constant 0.000000e+00 : f32
    %80 = vector.broadcast %cst_56 : f32 to vector<2x8x128xf32>
    %81 = vector.broadcast %cst_57 : f32 to vector<2x8x128xf32>
    %82 = arith.select %79, %80, %81 : vector<2x8x128xi1>, vector<2x8x128xf32>
    %83 = arith.truncf %82 : vector<2x8x128xf32> to vector<2x8x128xbf16>
    %c0_58 = arith.constant 0 : index
    %c3_59 = arith.constant 3 : index
    %c0_60 = arith.constant 0 : index
    %c0_61 = arith.constant 0 : index
    %84 = vector.load %arg5[%c0_58, %c3_59, %c0_60, %c0_61] : memref<2x8x8x128xbf16, #tpu.memory_space<vmem>>, vector<2x1x8x128xbf16>
    %85 = vector.shape_cast %84 : vector<2x1x8x128xbf16> to vector<2x8x128xbf16>
    %86 = vector.shape_cast %83 : vector<2x8x128xbf16> to vector<2x1x8x128xbf16>
    tpu.vector_store %arg5[%c0_58, %c3_59, %c0_60, %c0_61], %86 {strides = array<i32>} : memref<2x8x8x128xbf16, #tpu.memory_space<vmem>>, vector<2x1x8x128xbf16>,
    %cst_62 = arith.constant 0.000000e+00 : f32
    %87 = vector.broadcast %cst_62 : f32 to vector<2x8x128xf32>
    %88 = arith.select %79, %87, %76 : vector<2x8x128xi1>, vector<2x8x128xf32>
    %c0_63 = arith.constant 0 : index
    %c3_64 = arith.constant 3 : index
    %c0_65 = arith.constant 0 : index
    %c0_66 = arith.constant 0 : index
    %89 = vector.load %arg6[%c0_63, %c3_64, %c0_65, %c0_66] : memref<2x8x8x128xf32, #tpu.memory_space<vmem>>, vector<2x1x8x128xf32>
    %90 = vector.shape_cast %89 : vector<2x1x8x128xf32> to vector<2x8x128xf32>
    %91 = vector.shape_cast %88 : vector<2x8x128xf32> to vector<2x1x8x128xf32>
    tpu.vector_store %arg6[%c0_63, %c3_64, %c0_65, %c0_66], %91 {strides = array<i32>} : memref<2x8x8x128xf32, #tpu.memory_space<vmem>>, vector<2x1x8x128xf32>,
    %c0_67 = arith.constant 0 : index
    %c4 = arith.constant 4 : index
    %c0_68 = arith.constant 0 : index
    %c0_69 = arith.constant 0 : index
    %92 = vector.load %arg2[%c0_67, %c4, %c0_68, %c0_69] : memref<2x8x8x128xf32, #tpu.memory_space<vmem>>, vector<2x1x8x128xf32>
    %93 = vector.shape_cast %92 : vector<2x1x8x128xf32> to vector<2x8x128xf32>
    %94 = arith.subf %93, %88 : vector<2x8x128xf32>
    %95 = arith.mulf %94, %10 : vector<2x8x128xf32>
    %96 = arith.addf %95, %88 : vector<2x8x128xf32>
    %97 = arith.subf %96, %6 : vector<2x8x128xf32>
    %cst_70 = arith.constant 0.000000e+00 : f32
    %98 = vector.broadcast %cst_70 : f32 to vector<2x8x128xf32>
    %99 = arith.cmpf oge, %97, %98 : vector<2x8x128xf32>
    %cst_71 = arith.constant 1.000000e+00 : f32
    %cst_72 = arith.constant 0.000000e+00 : f32
    %100 = vector.broadcast %cst_71 : f32 to vector<2x8x128xf32>
    %101 = vector.broadcast %cst_72 : f32 to vector<2x8x128xf32>
    %102 = arith.select %99, %100, %101 : vector<2x8x128xi1>, vector<2x8x128xf32>
    %103 = arith.truncf %102 : vector<2x8x128xf32> to vector<2x8x128xbf16>
    %c0_73 = arith.constant 0 : index
    %c4_74 = arith.constant 4 : index
    %c0_75 = arith.constant 0 : index
    %c0_76 = arith.constant 0 : index
    %104 = vector.load %arg5[%c0_73, %c4_74, %c0_75, %c0_76] : memref<2x8x8x128xbf16, #tpu.memory_space<vmem>>, vector<2x1x8x128xbf16>
    %105 = vector.shape_cast %104 : vector<2x1x8x128xbf16> to vector<2x8x128xbf16>
    %106 = vector.shape_cast %103 : vector<2x8x128xbf16> to vector<2x1x8x128xbf16>
    tpu.vector_store %arg5[%c0_73, %c4_74, %c0_75, %c0_76], %106 {strides = array<i32>} : memref<2x8x8x128xbf16, #tpu.memory_space<vmem>>, vector<2x1x8x128xbf16>,
    %cst_77 = arith.constant 0.000000e+00 : f32
    %107 = vector.broadcast %cst_77 : f32 to vector<2x8x128xf32>
    %108 = arith.select %99, %107, %96 : vector<2x8x128xi1>, vector<2x8x128xf32>
    %c0_78 = arith.constant 0 : index
    %c4_79 = arith.constant 4 : index
    %c0_80 = arith.constant 0 : index
    %c0_81 = arith.constant 0 : index
    %109 = vector.load %arg6[%c0_78, %c4_79, %c0_80, %c0_81] : memref<2x8x8x128xf32, #tpu.memory_space<vmem>>, vector<2x1x8x128xf32>
    %110 = vector.shape_cast %109 : vector<2x1x8x128xf32> to vector<2x8x128xf32>
    %111 = vector.shape_cast %108 : vector<2x8x128xf32> to vector<2x1x8x128xf32>
    tpu.vector_store %arg6[%c0_78, %c4_79, %c0_80, %c0_81], %111 {strides = array<i32>} : memref<2x8x8x128xf32, #tpu.memory_space<vmem>>, vector<2x1x8x128xf32>,
    %c0_82 = arith.constant 0 : index
    %c5 = arith.constant 5 : index
    %c0_83 = arith.constant 0 : index
    %c0_84 = arith.constant 0 : index
    %112 = vector.load %arg2[%c0_82, %c5, %c0_83, %c0_84] : memref<2x8x8x128xf32, #tpu.memory_space<vmem>>, vector<2x1x8x128xf32>
    %113 = vector.shape_cast %112 : vector<2x1x8x128xf32> to vector<2x8x128xf32>
    %114 = arith.subf %113, %108 : vector<2x8x128xf32>
    %115 = arith.mulf %114, %10 : vector<2x8x128xf32>
    %116 = arith.addf %115, %108 : vector<2x8x128xf32>
    %117 = arith.subf %116, %6 : vector<2x8x128xf32>
    %cst_85 = arith.constant 0.000000e+00 : f32
    %118 = vector.broadcast %cst_85 : f32 to vector<2x8x128xf32>
    %119 = arith.cmpf oge, %117, %118 : vector<2x8x128xf32>
    %cst_86 = arith.constant 1.000000e+00 : f32
    %cst_87 = arith.constant 0.000000e+00 : f32
    %120 = vector.broadcast %cst_86 : f32 to vector<2x8x128xf32>
    %121 = vector.broadcast %cst_87 : f32 to vector<2x8x128xf32>
    %122 = arith.select %119, %120, %121 : vector<2x8x128xi1>, vector<2x8x128xf32>
    %123 = arith.truncf %122 : vector<2x8x128xf32> to vector<2x8x128xbf16>
    %c0_88 = arith.constant 0 : index
    %c5_89 = arith.constant 5 : index
    %c0_90 = arith.constant 0 : index
    %c0_91 = arith.constant 0 : index
    %124 = vector.load %arg5[%c0_88, %c5_89, %c0_90, %c0_91] : memref<2x8x8x128xbf16, #tpu.memory_space<vmem>>, vector<2x1x8x128xbf16>
    %125 = vector.shape_cast %124 : vector<2x1x8x128xbf16> to vector<2x8x128xbf16>
    %126 = vector.shape_cast %123 : vector<2x8x128xbf16> to vector<2x1x8x128xbf16>
    tpu.vector_store %arg5[%c0_88, %c5_89, %c0_90, %c0_91], %126 {strides = array<i32>} : memref<2x8x8x128xbf16, #tpu.memory_space<vmem>>, vector<2x1x8x128xbf16>,
    %cst_92 = arith.constant 0.000000e+00 : f32
    %127 = vector.broadcast %cst_92 : f32 to vector<2x8x128xf32>
    %128 = arith.select %119, %127, %116 : vector<2x8x128xi1>, vector<2x8x128xf32>
    %c0_93 = arith.constant 0 : index
    %c5_94 = arith.constant 5 : index
    %c0_95 = arith.constant 0 : index
    %c0_96 = arith.constant 0 : index
    %129 = vector.load %arg6[%c0_93, %c5_94, %c0_95, %c0_96] : memref<2x8x8x128xf32, #tpu.memory_space<vmem>>, vector<2x1x8x128xf32>
    %130 = vector.shape_cast %129 : vector<2x1x8x128xf32> to vector<2x8x128xf32>
    %131 = vector.shape_cast %128 : vector<2x8x128xf32> to vector<2x1x8x128xf32>
    tpu.vector_store %arg6[%c0_93, %c5_94, %c0_95, %c0_96], %131 {strides = array<i32>} : memref<2x8x8x128xf32, #tpu.memory_space<vmem>>, vector<2x1x8x128xf32>,
    %c0_97 = arith.constant 0 : index
    %c6 = arith.constant 6 : index
    %c0_98 = arith.constant 0 : index
    %c0_99 = arith.constant 0 : index
    %132 = vector.load %arg2[%c0_97, %c6, %c0_98, %c0_99] : memref<2x8x8x128xf32, #tpu.memory_space<vmem>>, vector<2x1x8x128xf32>
    %133 = vector.shape_cast %132 : vector<2x1x8x128xf32> to vector<2x8x128xf32>
    %134 = arith.subf %133, %128 : vector<2x8x128xf32>
    %135 = arith.mulf %134, %10 : vector<2x8x128xf32>
    %136 = arith.addf %135, %128 : vector<2x8x128xf32>
    %137 = arith.subf %136, %6 : vector<2x8x128xf32>
    %cst_100 = arith.constant 0.000000e+00 : f32
    %138 = vector.broadcast %cst_100 : f32 to vector<2x8x128xf32>
    %139 = arith.cmpf oge, %137, %138 : vector<2x8x128xf32>
    %cst_101 = arith.constant 1.000000e+00 : f32
    %cst_102 = arith.constant 0.000000e+00 : f32
    %140 = vector.broadcast %cst_101 : f32 to vector<2x8x128xf32>
    %141 = vector.broadcast %cst_102 : f32 to vector<2x8x128xf32>
    %142 = arith.select %139, %140, %141 : vector<2x8x128xi1>, vector<2x8x128xf32>
    %143 = arith.truncf %142 : vector<2x8x128xf32> to vector<2x8x128xbf16>
    %c0_103 = arith.constant 0 : index
    %c6_104 = arith.constant 6 : index
    %c0_105 = arith.constant 0 : index
    %c0_106 = arith.constant 0 : index
    %144 = vector.load %arg5[%c0_103, %c6_104, %c0_105, %c0_106] : memref<2x8x8x128xbf16, #tpu.memory_space<vmem>>, vector<2x1x8x128xbf16>
    %145 = vector.shape_cast %144 : vector<2x1x8x128xbf16> to vector<2x8x128xbf16>
    %146 = vector.shape_cast %143 : vector<2x8x128xbf16> to vector<2x1x8x128xbf16>
    tpu.vector_store %arg5[%c0_103, %c6_104, %c0_105, %c0_106], %146 {strides = array<i32>} : memref<2x8x8x128xbf16, #tpu.memory_space<vmem>>, vector<2x1x8x128xbf16>,
    %cst_107 = arith.constant 0.000000e+00 : f32
    %147 = vector.broadcast %cst_107 : f32 to vector<2x8x128xf32>
    %148 = arith.select %139, %147, %136 : vector<2x8x128xi1>, vector<2x8x128xf32>
    %c0_108 = arith.constant 0 : index
    %c6_109 = arith.constant 6 : index
    %c0_110 = arith.constant 0 : index
    %c0_111 = arith.constant 0 : index
    %149 = vector.load %arg6[%c0_108, %c6_109, %c0_110, %c0_111] : memref<2x8x8x128xf32, #tpu.memory_space<vmem>>, vector<2x1x8x128xf32>
    %150 = vector.shape_cast %149 : vector<2x1x8x128xf32> to vector<2x8x128xf32>
    %151 = vector.shape_cast %148 : vector<2x8x128xf32> to vector<2x1x8x128xf32>
    tpu.vector_store %arg6[%c0_108, %c6_109, %c0_110, %c0_111], %151 {strides = array<i32>} : memref<2x8x8x128xf32, #tpu.memory_space<vmem>>, vector<2x1x8x128xf32>,
    %c0_112 = arith.constant 0 : index
    %c7 = arith.constant 7 : index
    %c0_113 = arith.constant 0 : index
    %c0_114 = arith.constant 0 : index
    %152 = vector.load %arg2[%c0_112, %c7, %c0_113, %c0_114] : memref<2x8x8x128xf32, #tpu.memory_space<vmem>>, vector<2x1x8x128xf32>
    %153 = vector.shape_cast %152 : vector<2x1x8x128xf32> to vector<2x8x128xf32>
    %154 = arith.subf %153, %148 : vector<2x8x128xf32>
    %155 = arith.mulf %154, %10 : vector<2x8x128xf32>
    %156 = arith.addf %155, %148 : vector<2x8x128xf32>
    %157 = arith.subf %156, %6 : vector<2x8x128xf32>
    %cst_115 = arith.constant 0.000000e+00 : f32
    %158 = vector.broadcast %cst_115 : f32 to vector<2x8x128xf32>
    %159 = arith.cmpf oge, %157, %158 : vector<2x8x128xf32>
    %cst_116 = arith.constant 1.000000e+00 : f32
    %cst_117 = arith.constant 0.000000e+00 : f32
    %160 = vector.broadcast %cst_116 : f32 to vector<2x8x128xf32>
    %161 = vector.broadcast %cst_117 : f32 to vector<2x8x128xf32>
    %162 = arith.select %159, %160, %161 : vector<2x8x128xi1>, vector<2x8x128xf32>
    %163 = arith.truncf %162 : vector<2x8x128xf32> to vector<2x8x128xbf16>
    %c0_118 = arith.constant 0 : index
    %c7_119 = arith.constant 7 : index
    %c0_120 = arith.constant 0 : index
    %c0_121 = arith.constant 0 : index
    %164 = vector.load %arg5[%c0_118, %c7_119, %c0_120, %c0_121] : memref<2x8x8x128xbf16, #tpu.memory_space<vmem>>, vector<2x1x8x128xbf16>
    %165 = vector.shape_cast %164 : vector<2x1x8x128xbf16> to vector<2x8x128xbf16>
    %166 = vector.shape_cast %163 : vector<2x8x128xbf16> to vector<2x1x8x128xbf16>
    tpu.vector_store %arg5[%c0_118, %c7_119, %c0_120, %c0_121], %166 {strides = array<i32>} : memref<2x8x8x128xbf16, #tpu.memory_space<vmem>>, vector<2x1x8x128xbf16>,
    %cst_122 = arith.constant 0.000000e+00 : f32
    %167 = vector.broadcast %cst_122 : f32 to vector<2x8x128xf32>
    %168 = arith.select %159, %167, %156 : vector<2x8x128xi1>, vector<2x8x128xf32>
    %c0_123 = arith.constant 0 : index
    %c7_124 = arith.constant 7 : index
    %c0_125 = arith.constant 0 : index
    %c0_126 = arith.constant 0 : index
    %169 = vector.load %arg6[%c0_123, %c7_124, %c0_125, %c0_126] : memref<2x8x8x128xf32, #tpu.memory_space<vmem>>, vector<2x1x8x128xf32>
    %170 = vector.shape_cast %169 : vector<2x1x8x128xf32> to vector<2x8x128xf32>
    %171 = vector.shape_cast %168 : vector<2x8x128xf32> to vector<2x1x8x128xf32>
    tpu.vector_store %arg6[%c0_123, %c7_124, %c0_125, %c0_126], %171 {strides = array<i32>} : memref<2x8x8x128xf32, #tpu.memory_space<vmem>>, vector<2x1x8x128xf32>,
    %c0_127 = arith.constant 0 : index
    %c0_128 = arith.constant 0 : index
    %c0_129 = arith.constant 0 : index
    %172 = vector.load %arg7[%c0_127, %c0_128, %c0_129] : memref<2x8x128xf32, #tpu.memory_space<vmem>>, vector<2x8x128xf32>
    tpu.vector_store %arg7[%c0_127, %c0_128, %c0_129], %168 {strides = array<i32>} : memref<2x8x128xf32, #tpu.memory_space<vmem>>, vector<2x8x128xf32>,
    return
  }
  func.func @transform_0(%arg0: i32, %arg1: i32) -> (i32, i32, i32, i32) {
    %c0_i32 = arith.constant 0 : i32
    %c0_i32_0 = arith.constant 0 : i32
    %c0_i32_1 = arith.constant 0 : i32
    return %c0_i32, %arg1, %arg0, %c0_i32_0 : i32, i32, i32, i32
  }
  func.func @transform_1(%arg0: i32, %arg1: i32) -> (i32, i32) {
    %c0_i32 = arith.constant 0 : i32
    %c0_i32_0 = arith.constant 0 : i32
    return %arg0, %c0_i32 : i32, i32
  }
  func.func @transform_2(%arg0: i32, %arg1: i32) -> (i32, i32) {
    %c0_i32 = arith.constant 0 : i32
    %c0_i32_0 = arith.constant 0 : i32
    return %arg0, %c0_i32 : i32, i32
  }
  func.func @transform_3(%arg0: i32, %arg1: i32) -> (i32, i32, i32, i32) {
    %c0_i32 = arith.constant 0 : i32
    %c0_i32_0 = arith.constant 0 : i32
    %c0_i32_1 = arith.constant 0 : i32
    return %c0_i32, %arg1, %arg0, %c0_i32_0 : i32, i32, i32, i32
  }
  func.func @transform_4(%arg0: i32, %arg1: i32) -> (i32, i32, i32, i32) {
    %c0_i32 = arith.constant 0 : i32
    %c0_i32_0 = arith.constant 0 : i32
    %c0_i32_1 = arith.constant 0 : i32
    return %c0_i32, %arg1, %arg0, %c0_i32_0 : i32, i32, i32, i32
  }
}

</mosaic_0001>

<llo_original>
// kernel: tpu_custom_call.1
$region0: #{tpu_custom_call.1}
  #allocation0 [shape = 'u32[]', space=smem, size = 0x4, offset = 0x4, fixed_abs, tag = 'smem constant byte address 0x4 - core index']
  #allocation1 [shape = 'u32[144,128]{1,0:T(1,128)}', space=vmem, size = 0x12000, scoped, tag = 'internal scratch']
  #allocation2 [shape = 'f32[2,8,128]{2,1,0:T(8,128)}', space=vmem, size = 0x2000, scoped, tag = 'scratch operand']
  %s0 = inlined_call_operand.hbm [shape: f32[2,8,8,128], index: 0, kind: input, shape index: {}]
  %s1 = inlined_call_operand.hbm [shape: f32[8,128], index: 1, kind: input, shape index: {}]
  %s2 = inlined_call_operand.hbm [shape: f32[8,128], index: 2, kind: input, shape index: {}]
  %s3 = inlined_call_operand.hbm [shape: bf16[2,8,8,128], index: 3, kind: output, shape index: {0}]
  %s4 = inlined_call_operand.hbm [shape: f32[2,8,8,128], index: 4, kind: output, shape index: {1}]
  %5 = xla_tuple %s3, %s4
  %s6 = sld [smem:[#allocation0]]
  $region46: #{tpu_custom_call.1} parent=0
    _
  %s8 = ssub.s32 1, %s6
  %s9 = scalar_select 0, %s8, %s6
  $region1: #{tpu_custom_call.1} parent=0
    #allocation3 [shape = 'u8[65536]{0}', space=vmem, size = 0x10000, scoped, tag = 'input window, operand 0, single buffered']
    #allocation4 [shape = 's32[1]{0}', space=sflag, size = 0x4, scoped, tag = 'scoped memory for tpu_custom_call.1']
    #allocation5 [shape = 's32[1]{0}', space=sflag, size = 0x4, scoped, tag = 'scoped memory for tpu_custom_call.1']
    #allocation6 [shape = 'u8[4096]{0}', space=vmem, size = 0x1000, scoped, tag = 'input window, operand 1, single buffered']
    #allocation7 [shape = 's32[1]{0}', space=sflag, size = 0x4, scoped, tag = 'scoped memory for tpu_custom_call.1']
    #allocation8 [shape = 'u8[4096]{0}', space=vmem, size = 0x1000, scoped, tag = 'input window, operand 2, single buffered']
    #allocation9 [shape = 'u8[32768]{0}', space=vmem, size = 0x8000, scoped, tag = 'output window, operand 0, single buffered']
    #allocation10 [shape = 'u8[65536]{0}', space=vmem, size = 0x10000, scoped, tag = 'output window, operand 1, single buffered']
    #allocation11 [shape = 's32[1]{0}', space=sflag, size = 0x4, scoped, tag = 'scoped memory for tpu_custom_call.1']
    %10 = vsyncpa [#allocation4], 0
    %11 = vsyncpa [#allocation7], 0
    %12 = vsyncpa [#allocation5], 0
    %13 = vsyncpa [#allocation11], 0
    // Predicated region
    $region2: #{tpu_custom_call.1} parent=1 // pred_check
      _
    $region3: #{tpu_custom_call.1} parent=1 // pred_check_branch
      %15 = sbr.rel (0) target = $region5
    $region4: #{tpu_custom_call.1} parent=1 // pred_region
      %s17 = ssub.s32 2048, 2048
      %18 = vsyncadd [#allocation4], %s17
      %s19 = sshll.u32 [#allocation3], 4
      %s20 = int_to_ptr.vmem [resolvable:$true] %s19
      %25 = dma.hbm_to_vmem [thread:$0]  %s0, 2048, %s20, [#allocation4], 128, 128, 8
    $region5: #{tpu_custom_call.1} parent=1 // pred_fallthru
      _
    // Predicated region
    $region6: #{tpu_custom_call.1} parent=1 // pred_check
      _
    $region7: #{tpu_custom_call.1} parent=1 // pred_check_branch
      %27 = sbr.rel (0) target = $region9
    $region8: #{tpu_custom_call.1} parent=1 // pred_region
      %s29 = ssub.s32 128, 128
      %30 = vsyncadd [#allocation7], %s29
      %s32 = sshll.u32 [#allocation6], 4
      %s33 = int_to_ptr.vmem [resolvable:$true] %s32
      %35 = dma.hbm_to_vmem [thread:$0]  %s1, 128, %s33, [#allocation7]
    $region9: #{tpu_custom_call.1} parent=1 // pred_fallthru
      _
    // Predicated region
    $region10: #{tpu_custom_call.1} parent=1 // pred_check
      _
    $region11: #{tpu_custom_call.1} parent=1 // pred_check_branch
      %37 = sbr.rel (0) target = $region13
    $region12: #{tpu_custom_call.1} parent=1 // pred_region
      %s39 = ssub.s32 128, 128
      %40 = vsyncadd [#allocation7], %s39
      %s42 = sshll.u32 [#allocation8], 4
      %s43 = int_to_ptr.vmem [resolvable:$true] %s42
      %45 = dma.hbm_to_vmem [thread:$0]  %s2, 128, %s43, [#allocation7]
    $region13: #{tpu_custom_call.1} parent=1 // pred_fallthru
      _
    // Predicated region
    $region14: #{tpu_custom_call.1} parent=1 // pred_check
      _
    $region15: #{tpu_custom_call.1} parent=1 // pred_check_branch
      %47 = sbr.rel (0) target = $region17
    $region16: #{tpu_custom_call.1} parent=1 // pred_region
      %48 = dma.done [#allocation4], 2048
    $region17: #{tpu_custom_call.1} parent=1 // pred_fallthru
      _
    // Predicated region
    $region18: #{tpu_custom_call.1} parent=1 // pred_check
      _
    $region19: #{tpu_custom_call.1} parent=1 // pred_check_branch
      %50 = sbr.rel (0) target = $region21
    $region20: #{tpu_custom_call.1} parent=1 // pred_region
      %51 = dma.done [#allocation7], 128
    $region21: #{tpu_custom_call.1} parent=1 // pred_fallthru
      _
    // Predicated region
    $region22: #{tpu_custom_call.1} parent=1 // pred_check
      _
    $region23: #{tpu_custom_call.1} parent=1 // pred_check_branch
      %53 = sbr.rel (0) target = $region25
    $region24: #{tpu_custom_call.1} parent=1 // pred_region
      %54 = dma.done [#allocation7], 128
    $region25: #{tpu_custom_call.1} parent=1 // pred_fallthru
      _
    %p55 = scmp.eq.s32.totalorder 0, 0
    // Predicated region
    $region26: #{tpu_custom_call.1} parent=1 // pred_check
      %p56 = pneg %p55
    $region27: #{tpu_custom_call.1} parent=1 // pred_check_branch
      %58 = sbr.rel (%p56) target = $region29
    $region28: #{tpu_custom_call.1} parent=1 // pred_region
      %59 = vst [vmem:[#allocation2] sm:$0xff] 0.0
      %60 = vst [vmem:[#allocation2 + $0x8] sm:$0xff] 0.0
    $region29: #{tpu_custom_call.1} parent=1 // pred_fallthru
      _
    %v61 = vld [vmem:[#allocation6] sm:$0xff]
    %v62 = vld [vmem:[#allocation8] sm:$0xff]
    %v63 = vld [vmem:[#allocation2] sm:$0xff]
    %v64 = vld [vmem:[#allocation2 + $0x8] sm:$0xff]
    %v65 = vld [vmem:[#allocation3] sm:$0xff]
    %v66 = vld [vmem:[#allocation3 + $0x40] sm:$0xff]
    %v67 = vsub.f32 %v65, %v63
    %v68 = vsub.f32 %v66, %v64
    %v69 = vmul.f32 %v67, %v62
    %v70 = vmul.f32 %v68, %v62
    %v71 = vadd.f32 %v69, %v63
    %v72 = vadd.f32 %v70, %v64
    %v73 = vsub.f32 %v71, %v61
    %v74 = vsub.f32 %v72, %v61
    %vm75 = vcmp.ge.f32.partialorder %v73, 0.0
    %vm76 = vcmp.ge.f32.partialorder %v74, 0.0
    %v77 = vsel %vm75, 1.0, 0.0
    %v78 = vsel %vm76, 1.0, 0.0
    %v79 = vpack.c.bf16 %v77, %v77
    %v80 = vpack.c.bf16 %v78, %v78
    %81 = vst [vmem:[#allocation9] sm:$0xf] %v79
    %82 = vst [vmem:[#allocation9 + $0x20] sm:$0xf] %v80
    %v83 = vsel %vm75, 0.0, %v71
    %v84 = vsel %vm76, 0.0, %v72
    %85 = vst [vmem:[#allocation10] sm:$0xff] %v83
    %86 = vst [vmem:[#allocation10 + $0x40] sm:$0xff] %v84
    %s87 = scalar_lea.vmem [#allocation3], 8
    %v88 = vld [vmem:[%s87] sm:$0xff]
    %v89 = vld [vmem:[%s87 + $0x40] sm:$0xff]
    %v90 = vsub.f32 %v88, %v83
    %v91 = vsub.f32 %v89, %v84
    %v92 = vmul.f32 %v90, %v62
    %v93 = vmul.f32 %v91, %v62
    %v94 = vadd.f32 %v92, %v83
    %v95 = vadd.f32 %v93, %v84
    %v96 = vsub.f32 %v94, %v61
    %v97 = vsub.f32 %v95, %v61
    %vm98 = vcmp.ge.f32.partialorder %v96, 0.0
    %vm99 = vcmp.ge.f32.partialorder %v97, 0.0
    %v100 = vsel %vm98, 1.0, 0.0
    %v101 = vsel %vm99, 1.0, 0.0
    %v102 = vpack.c.bf16 %v100, %v100
    %v103 = vpack.c.bf16 %v101, %v101
    %s104 = scalar_lea.vmem [#allocation9], 4
    %105 = vst [vmem:[%s104] sm:$0xf] %v102
    %106 = vst [vmem:[%s104 + $0x20] sm:$0xf] %v103
    %v107 = vsel %vm98, 0.0, %v94
    %v108 = vsel %vm99, 0.0, %v95
    %s109 = scalar_lea.vmem [#allocation10], 8
    %110 = vst [vmem:[%s109] sm:$0xff] %v107
    %111 = vst [vmem:[%s109 + $0x40] sm:$0xff] %v108
    %s112 = scalar_lea.vmem [#allocation3], 16
    %v113 = vld [vmem:[%s112] sm:$0xff]
    %v114 = vld [vmem:[%s112 + $0x40] sm:$0xff]
    %v115 = vsub.f32 %v113, %v107
    %v116 = vsub.f32 %v114, %v108
    %v117 = vmul.f32 %v115, %v62
    %v118 = vmul.f32 %v116, %v62
    %v119 = vadd.f32 %v117, %v107
    %v120 = vadd.f32 %v118, %v108
    %v121 = vsub.f32 %v119, %v61
    %v122 = vsub.f32 %v120, %v61
    %vm123 = vcmp.ge.f32.partialorder %v121, 0.0
    %vm124 = vcmp.ge.f32.partialorder %v122, 0.0
    %v125 = vsel %vm123, 1.0, 0.0
    %v126 = vsel %vm124, 1.0, 0.0
    %v127 = vpack.c.bf16 %v125, %v125
    %v128 = vpack.c.bf16 %v126, %v126
    %s129 = scalar_lea.vmem [#allocation9], 8
    %130 = vst [vmem:[%s129] sm:$0xf] %v127
    %131 = vst [vmem:[%s129 + $0x20] sm:$0xf] %v128
    %v132 = vsel %vm123, 0.0, %v119
    %v133 = vsel %vm124, 0.0, %v120
    %s134 = scalar_lea.vmem [#allocation10], 16
    %135 = vst [vmem:[%s134] sm:$0xff] %v132
    %136 = vst [vmem:[%s134 + $0x40] sm:$0xff] %v133
    %s137 = scalar_lea.vmem [#allocation3], 24
    %v138 = vld [vmem:[%s137] sm:$0xff]
    %v139 = vld [vmem:[%s137 + $0x40] sm:$0xff]
    %v140 = vsub.f32 %v138, %v132
    %v141 = vsub.f32 %v139, %v133
    %v142 = vmul.f32 %v140, %v62
    %v143 = vmul.f32 %v141, %v62
    %v144 = vadd.f32 %v142, %v132
    %v145 = vadd.f32 %v143, %v133
    %v146 = vsub.f32 %v144, %v61
    %v147 = vsub.f32 %v145, %v61
    %vm148 = vcmp.ge.f32.partialorder %v146, 0.0
    %vm149 = vcmp.ge.f32.partialorder %v147, 0.0
    %v150 = vsel %vm148, 1.0, 0.0
    %v151 = vsel %vm149, 1.0, 0.0
    %v152 = vpack.c.bf16 %v150, %v150
    %v153 = vpack.c.bf16 %v151, %v151
    %s154 = scalar_lea.vmem [#allocation9], 12
    %155 = vst [vmem:[%s154] sm:$0xf] %v152
    %156 = vst [vmem:[%s154 + $0x20] sm:$0xf] %v153
    %v157 = vsel %vm148, 0.0, %v144
    %v158 = vsel %vm149, 0.0, %v145
    %s159 = scalar_lea.vmem [#allocation10], 24
    %160 = vst [vmem:[%s159] sm:$0xff] %v157
    %161 = vst [vmem:[%s159 + $0x40] sm:$0xff] %v158
    %s162 = scalar_lea.vmem [#allocation3], 32
    %v163 = vld [vmem:[%s162] sm:$0xff]
    %v164 = vld [vmem:[%s162 + $0x40] sm:$0xff]
    %v165 = vsub.f32 %v163, %v157
    %v166 = vsub.f32 %v164, %v158
    %v167 = vmul.f32 %v165, %v62
    %v168 = vmul.f32 %v166, %v62
    %v169 = vadd.f32 %v167, %v157
    %v170 = vadd.f32 %v168, %v158
    %v171 = vsub.f32 %v169, %v61
    %v172 = vsub.f32 %v170, %v61
    %vm173 = vcmp.ge.f32.partialorder %v171, 0.0
    %vm174 = vcmp.ge.f32.partialorder %v172, 0.0
    %v175 = vsel %vm173, 1.0, 0.0
    %v176 = vsel %vm174, 1.0, 0.0
    %v177 = vpack.c.bf16 %v175, %v175
    %v178 = vpack.c.bf16 %v176, %v176
    %s179 = scalar_lea.vmem [#allocation9], 16
    %180 = vst [vmem:[%s179] sm:$0xf] %v177
    %181 = vst [vmem:[%s179 + $0x20] sm:$0xf] %v178
    %v182 = vsel %vm173, 0.0, %v169
    %v183 = vsel %vm174, 0.0, %v170
    %s184 = scalar_lea.vmem [#allocation10], 32
    %185 = vst [vmem:[%s184] sm:$0xff] %v182
    %186 = vst [vmem:[%s184 + $0x40] sm:$0xff] %v183
    %s187 = scalar_lea.vmem [#allocation3], 40
    %v188 = vld [vmem:[%s187] sm:$0xff]
    %v189 = vld [vmem:[%s187 + $0x40] sm:$0xff]
    %v190 = vsub.f32 %v188, %v182
    %v191 = vsub.f32 %v189, %v183
    %v192 = vmul.f32 %v190, %v62
    %v193 = vmul.f32 %v191, %v62
    %v194 = vadd.f32 %v192, %v182
    %v195 = vadd.f32 %v193, %v183
    %v196 = vsub.f32 %v194, %v61
    %v197 = vsub.f32 %v195, %v61
    %vm198 = vcmp.ge.f32.partialorder %v196, 0.0
    %vm199 = vcmp.ge.f32.partialorder %v197, 0.0
    %v200 = vsel %vm198, 1.0, 0.0
    %v201 = vsel %vm199, 1.0, 0.0
    %v202 = vpack.c.bf16 %v200, %v200
    %v203 = vpack.c.bf16 %v201, %v201
    %s204 = scalar_lea.vmem [#allocation9], 20
    %205 = vst [vmem:[%s204] sm:$0xf] %v202
    %206 = vst [vmem:[%s204 + $0x20] sm:$0xf] %v203
    %v207 = vsel %vm198, 0.0, %v194
    %v208 = vsel %vm199, 0.0, %v195
    %s209 = scalar_lea.vmem [#allocation10], 40
    %210 = vst [vmem:[%s209] sm:$0xff] %v207
    %211 = vst [vmem:[%s209 + $0x40] sm:$0xff] %v208
    %s212 = scalar_lea.vmem [#allocation3], 48
    %v213 = vld [vmem:[%s212] sm:$0xff]
    %v214 = vld [vmem:[%s212 + $0x40] sm:$0xff]
    %v215 = vsub.f32 %v213, %v207
    %v216 = vsub.f32 %v214, %v208
    %v217 = vmul.f32 %v215, %v62
    %v218 = vmul.f32 %v216, %v62
    %v219 = vadd.f32 %v217, %v207
    %v220 = vadd.f32 %v218, %v208
    %v221 = vsub.f32 %v219, %v61
    %v222 = vsub.f32 %v220, %v61
    %vm223 = vcmp.ge.f32.partialorder %v221, 0.0
    %vm224 = vcmp.ge.f32.partialorder %v222, 0.0
    %v225 = vsel %vm223, 1.0, 0.0
    %v226 = vsel %vm224, 1.0, 0.0
    %v227 = vpack.c.bf16 %v225, %v225
    %v228 = vpack.c.bf16 %v226, %v226
    %s229 = scalar_lea.vmem [#allocation9], 24
    %230 = vst [vmem:[%s229] sm:$0xf] %v227
    %231 = vst [vmem:[%s229 + $0x20] sm:$0xf] %v228
    %v232 = vsel %vm223, 0.0, %v219
    %v233 = vsel %vm224, 0.0, %v220
    %s234 = scalar_lea.vmem [#allocation10], 48
    %235 = vst [vmem:[%s234] sm:$0xff] %v232
    %236 = vst [vmem:[%s234 + $0x40] sm:$0xff] %v233
    %s237 = scalar_lea.vmem [#allocation3], 56
    %v238 = vld [vmem:[%s237] sm:$0xff]
    %v239 = vld [vmem:[%s237 + $0x40] sm:$0xff]
    %v240 = vsub.f32 %v238, %v232
    %v241 = vsub.f32 %v239, %v233
    %v242 = vmul.f32 %v240, %v62
    %v243 = vmul.f32 %v241, %v62
    %v244 = vadd.f32 %v242, %v232
    %v245 = vadd.f32 %v243, %v233
    %v246 = vsub.f32 %v244, %v61
    %v247 = vsub.f32 %v245, %v61
    %vm248 = vcmp.ge.f32.partialorder %v246, 0.0
    %vm249 = vcmp.ge.f32.partialorder %v247, 0.0
    %v250 = vsel %vm248, 1.0, 0.0
    %v251 = vsel %vm249, 1.0, 0.0
    %v252 = vpack.c.bf16 %v250, %v250
    %v253 = vpack.c.bf16 %v251, %v251
    %s254 = scalar_lea.vmem [#allocation9], 28
    %255 = vst [vmem:[%s254] sm:$0xf] %v252
    %256 = vst [vmem:[%s254 + $0x20] sm:$0xf] %v253
    %v257 = vsel %vm248, 0.0, %v244
    %v258 = vsel %vm249, 0.0, %v245
    %s259 = scalar_lea.vmem [#allocation10], 56
    %260 = vst [vmem:[%s259] sm:$0xff] %v257
    %261 = vst [vmem:[%s259 + $0x40] sm:$0xff] %v258
    %262 = vst [vmem:[#allocation2] sm:$0xff] %v257
    %263 = vst [vmem:[#allocation2 + $0x8] sm:$0xff] %v258
    // Predicated region
    $region30: #{tpu_custom_call.1} parent=1 // pred_check
      _
    $region31: #{tpu_custom_call.1} parent=1 // pred_check_branch
      %265 = sbr.rel (0) target = $region33
    $region32: #{tpu_custom_call.1} parent=1 // pred_region
      %s267 = ssub.s32 1024, 1024
      %268 = vsyncadd [#allocation5], %s267
      %s269 = sshll.u32 [#allocation9], 4
      %s270 = int_to_ptr.vmem [resolvable:$true] %s269
      %275 = dma.vmem_to_hbm [thread:$0]  %s270, 1024, %s3, [#allocation5], 64, 64, 4
    $region33: #{tpu_custom_call.1} parent=1 // pred_fallthru
      _
    // Predicated region
    $region34: #{tpu_custom_call.1} parent=1 // pred_check
      _
    $region35: #{tpu_custom_call.1} parent=1 // pred_check_branch
      %277 = sbr.rel (0) target = $region37
    $region36: #{tpu_custom_call.1} parent=1 // pred_region
      %s279 = ssub.s32 2048, 2048
      %280 = vsyncadd [#allocation11], %s279
      %s281 = sshll.u32 [#allocation10], 4
      %s282 = int_to_ptr.vmem [resolvable:$true] %s281
      %287 = dma.vmem_to_hbm [thread:$0]  %s282, 2048, %s4, [#allocation11], 128, 128, 8
    $region37: #{tpu_custom_call.1} parent=1 // pred_fallthru
      _
    // Predicated region
    $region38: #{tpu_custom_call.1} parent=1 // pred_check
      _
    $region39: #{tpu_custom_call.1} parent=1 // pred_check_branch
      %289 = sbr.rel (0) target = $region41
    $region40: #{tpu_custom_call.1} parent=1 // pred_region
      %290 = dma.done [#allocation5], 1024
    $region41: #{tpu_custom_call.1} parent=1 // pred_fallthru
      _
    // Predicated region
    $region42: #{tpu_custom_call.1} parent=1 // pred_check
      _
    $region43: #{tpu_custom_call.1} parent=1 // pred_check_branch
      %292 = sbr.rel (0) target = $region45
    $region44: #{tpu_custom_call.1} parent=1 // pred_region
      %293 = dma.done [#allocation11], 2048
    $region45: #{tpu_custom_call.1} parent=1 // pred_fallthru
      _
    %294 = vsyncpa [#allocation4], 1
    %295 = vsyncpa [#allocation7], 1
    %296 = vsyncpa [#allocation5], 1
    %297 = vsyncpa [#allocation11], 1

</llo_original>
